<compile_context>
chip_gen: v7x
topology: tpu7x:2x2x1
jax: 0.10.0
libtpu: 0.0.40
codegen_flags: <defaults>
</compile_context>

<pallas_src>
import math

import numpy as np

import jax
import jax.numpy as jnp
from jax.experimental import pallas as pl
from jax.experimental.pallas import tpu as pltpu


def _round_up(x, m):
    return ((x + m - 1) // m) * m


def _pos_enc_kernel(x_ref, ind_ref, freq_ref, phase_ref, o_ref):
    # x_ref/o_ref: (tR, L)   ind_ref: (tR, G) int32
    # freq_ref:    (G,  L)   phase_ref: (1, L)
    # Lane j of a packed row belongs to position group g = j // D; freq_ref[g]
    # is the per-feature frequency masked to that group's lanes, so
    #   angle[r, j] = ind[r, j//D] * freq(j % D) + phase(j % D)
    G = ind_ref.shape[1]
    pos = ind_ref[...].astype(jnp.float32)            # (tR, G)
    freq = freq_ref[...]                              # (G, L)
    angle = pos[:, 0:1] * freq[0:1, :]                # (tR, L)
    for g in range(1, G):                             # static unroll, G <= 8
        angle = angle + pos[:, g:g + 1] * freq[g:g + 1, :]
    angle = angle + phase_ref[...]                    # + (1, L) broadcast
    o_ref[...] = x_ref[...] + jnp.sin(angle).astype(x_ref.dtype)


def positional_encoding(x, ind=None, *, row_tile=None):
    """x: [B, S, D] float; ind: [B, S] int (or None -> positions 0..S-1)."""
    B, S, D = x.shape
    if D % 2 != 0:
        raise ValueError("d_model must be even (same requirement as the PyTorch module)")

    if ind is None:
        ind = jnp.broadcast_to(jnp.arange(S, dtype=jnp.int32)[None, :], (B, S))
    ind = ind.astype(jnp.int32)

    N = B * S

    # Lane packing: put G consecutive positions in one 128-lane row when D < 128
    # so loads/stores are lane-dense (unmasked vst). No-op when D >= 128.
    if D < 128 and 128 % D == 0 and (128 // D) <= 8:
        G = 128 // D
    else:
        G = 1
    L = G * D

    itemsize = jnp.dtype(x.dtype).itemsize
    row_align = {4: 8, 2: 16, 1: 32}.get(itemsize, 8)   # sublane packing

    R = -(-N // G)                                       # packed rows (ceil)

    if row_tile is None:
        # ~1 MiB x-tile: big enough to amortize per-grid-step overhead, small
        # enough (with in/out double-buffering + f32 intermediates) for v7x's
        # smaller VMEM and for many grid steps to shard across TensorCores.
        max_tile_bytes = 1 * 1024 * 1024
        tR = min(2048, max(row_align, max_tile_bytes // (L * itemsize)))
    else:
        tR = max(row_align, row_tile)
    tR = _round_up(tR, row_align)
    tR = min(tR, _round_up(R, row_align))                # don't over-pad tiny inputs

    R_pad = _round_up(R, tR)
    N_pad = R_pad * G

    x_flat = x.reshape(N, D)
    ind_flat = ind.reshape(N)
    if N_pad != N:
        x_flat = jnp.pad(x_flat, ((0, N_pad - N), (0, 0)))
        ind_flat = jnp.pad(ind_flat, ((0, N_pad - N),))
    x_packed = x_flat.reshape(R_pad, L)
    ind_packed = ind_flat.reshape(R_pad, G)

    # Per-lane frequency / phase tables (computed once on host, tiny).
    d = np.arange(D)
    freq_d = np.exp(-(d - (d % 2)) * (math.log(10000.0) / D)).astype(np.float32)
    phase_d = np.where(d % 2 == 1, np.pi / 2.0, 0.0).astype(np.float32)  # cos = sin(.+pi/2)
    freq_sel = np.zeros((G, L), np.float32)
    for g in range(G):
        freq_sel[g, g * D:(g + 1) * D] = freq_d
    phase_l = np.tile(phase_d, G)[None, :]

    grid = (R_pad // tR,)

    out = pl.pallas_call(
        _pos_enc_kernel,
        out_shape=jax.ShapeDtypeStruct((R_pad, L), x.dtype),
        grid=grid,
        in_specs=[
            pl.BlockSpec((tR, L), lambda i: (i, 0)),
            pl.BlockSpec((tR, G), lambda i: (i, 0)),
            pl.BlockSpec((G, L), lambda i: (0, 0)),
            pl.BlockSpec((1, L), lambda i: (0, 0)),
        ],
        out_specs=pl.BlockSpec((tR, L), lambda i: (i, 0)),
        compiler_params=pltpu.CompilerParams(
            dimension_semantics=("parallel",),
            vmem_limit_bytes=32 * 1024 * 1024),
    )(x_packed, ind_packed, jnp.asarray(freq_sel), jnp.asarray(phase_l))

    return out.reshape(N_pad, D)[:N].reshape(B, S, D)


def _reference(x, ind, max_len=30000):
    """Pure-JAX re-implementation of the PyTorch module (eval mode)."""
    B, S, D = x.shape
    position = jnp.arange(max_len, dtype=jnp.float32)[:, None]
    div_term = jnp.exp(
        jnp.arange(0, D, 2, dtype=jnp.float32) * (-math.log(10000.0) / D))
    pe = jnp.zeros((max_len, D), jnp.float32)
    pe = pe.at[:, 0::2].set(jnp.sin(position * div_term))
    pe = pe.at[:, 1::2].set(jnp.cos(position * div_term))
    if ind is None:
        added = pe[None, :S, :]
    else:
        added = pe[ind, :]
    return (x.astype(jnp.float32) + added).astype(x.dtype)


if __name__ == "__main__":
    key = jax.random.PRNGKey(0)

    # --- small demo shapes (matches the module's forward) ---
    B, S, D = 2, 8, 32
    kx, ki, kx2, ki2 = jax.random.split(key, 4)
    x = jax.random.normal(kx, (B, S, D), dtype=jnp.float32)
    ind = jax.random.randint(ki, (B, S), minval=0, maxval=1024, dtype=jnp.int32)

    out = jax.block_until_ready(positional_encoding(x, ind))
    ref = _reference(x, ind)
    assert out.shape == (B, S, D) and out.dtype == x.dtype
    assert jnp.allclose(out, ref, atol=2e-3, rtol=2e-3), "mismatch vs reference (ind path)"

    # ind=None path (positions 0..S-1)
    out_none = jax.block_until_ready(positional_encoding(x, None))
    ref_none = _reference(x, None)
    assert jnp.allclose(out_none, ref_none, atol=2e-3, rtol=2e-3), \
        "mismatch vs reference (ind=None path)"

    # --- larger, non-divisible shape to exercise tiling + padding + packing ---
    B2, S2 = 2, 300
    x2 = jax.random.normal(kx2, (B2, S2, D), dtype=jnp.float32)
    ind2 = jax.random.randint(ki2, (B2, S2), minval=0, maxval=2048, dtype=jnp.int32)
    out2 = jax.block_until_ready(positional_encoding(x2, ind2, row_tile=32))  # grid=(5,)
    ref2 = _reference(x2, ind2)
    assert jnp.allclose(out2, ref2, atol=2e-3, rtol=2e-3), \
        "mismatch vs reference (tiled path)"

    print("KERNEL_OK")
</pallas_src>

<mosaic_0001>
module attributes {stable_mosaic.version = 11 : i64} {
  func.func @_pos_enc_kernel(%arg0: i32, %arg1: memref<8x128xf32, #tpu.memory_space<vmem>>, %arg2: memref<8x4xi32, #tpu.memory_space<vmem>>, %arg3: memref<4x128xf32, #tpu.memory_space<vmem>>, %arg4: memref<1x128xf32, #tpu.memory_space<vmem>>, %arg5: memref<8x128xf32, #tpu.memory_space<vmem>>) attributes {dimension_semantics = [#tpu.dimension_semantics<parallel>], iteration_bounds = array<i64: 1>, scalar_prefetch = 0 : i64, scratch_operands = 0 : i64, tpu.core_type = #tpu.core_type<tc>, window_params = [{transform_indices = @transform_0, window_bounds = array<i64: 8, 128>}, {transform_indices = @transform_1, window_bounds = array<i64: 8, 4>}, {pipeline_mode = #tpu.pipeline_mode<synchronous>, transform_indices = @transform_2, window_bounds = array<i64: 4, 128>}, {pipeline_mode = #tpu.pipeline_mode<synchronous>, transform_indices = @transform_3, window_bounds = array<i64: 1, 128>}, {transform_indices = @transform_4, window_bounds = array<i64: 8, 128>}]} {
    %c0 = arith.constant 0 : index
    %c0_0 = arith.constant 0 : index
    %0 = vector.load %arg2[%c0, %c0_0] : memref<8x4xi32, #tpu.memory_space<vmem>>, vector<8x4xi32>
    %1 = arith.sitofp %0 : vector<8x4xi32> to vector<8x4xf32>
    %c0_1 = arith.constant 0 : index
    %c0_2 = arith.constant 0 : index
    %2 = vector.load %arg3[%c0_1, %c0_2] : memref<4x128xf32, #tpu.memory_space<vmem>>, vector<4x128xf32>
    %3 = vector.extract_strided_slice %1 {offsets = [0, 0], sizes = [8, 1], strides = [1, 1]} : vector<8x4xf32> to vector<8x1xf32>
    %4 = vector.extract_strided_slice %2 {offsets = [0, 0], sizes = [1, 128], strides = [1, 1]} : vector<4x128xf32> to vector<1x128xf32>
    %5 = vector.broadcast %3 : vector<8x1xf32> to vector<8x128xf32>
    %6 = vector.broadcast %4 : vector<1x128xf32> to vector<8x128xf32>
    %7 = arith.mulf %5, %6 : vector<8x128xf32>
    %8 = vector.extract_strided_slice %1 {offsets = [0, 1], sizes = [8, 1], strides = [1, 1]} : vector<8x4xf32> to vector<8x1xf32>
    %9 = vector.extract_strided_slice %2 {offsets = [1, 0], sizes = [1, 128], strides = [1, 1]} : vector<4x128xf32> to vector<1x128xf32>
    %10 = vector.broadcast %8 : vector<8x1xf32> to vector<8x128xf32>
    %11 = vector.broadcast %9 : vector<1x128xf32> to vector<8x128xf32>
    %12 = arith.mulf %10, %11 : vector<8x128xf32>
    %13 = arith.addf %7, %12 : vector<8x128xf32>
    %14 = vector.extract_strided_slice %1 {offsets = [0, 2], sizes = [8, 1], strides = [1, 1]} : vector<8x4xf32> to vector<8x1xf32>
    %15 = vector.extract_strided_slice %2 {offsets = [2, 0], sizes = [1, 128], strides = [1, 1]} : vector<4x128xf32> to vector<1x128xf32>
    %16 = vector.broadcast %14 : vector<8x1xf32> to vector<8x128xf32>
    %17 = vector.broadcast %15 : vector<1x128xf32> to vector<8x128xf32>
    %18 = arith.mulf %16, %17 : vector<8x128xf32>
    %19 = arith.addf %13, %18 : vector<8x128xf32>
    %20 = vector.extract_strided_slice %1 {offsets = [0, 3], sizes = [8, 1], strides = [1, 1]} : vector<8x4xf32> to vector<8x1xf32>
    %21 = vector.extract_strided_slice %2 {offsets = [3, 0], sizes = [1, 128], strides = [1, 1]} : vector<4x128xf32> to vector<1x128xf32>
    %22 = vector.broadcast %20 : vector<8x1xf32> to vector<8x128xf32>
    %23 = vector.broadcast %21 : vector<1x128xf32> to vector<8x128xf32>
    %24 = arith.mulf %22, %23 : vector<8x128xf32>
    %25 = arith.addf %19, %24 : vector<8x128xf32>
    %c0_3 = arith.constant 0 : index
    %c0_4 = arith.constant 0 : index
    %26 = vector.load %arg4[%c0_3, %c0_4] : memref<1x128xf32, #tpu.memory_space<vmem>>, vector<1x128xf32>
    %27 = vector.broadcast %26 : vector<1x128xf32> to vector<8x128xf32>
    %28 = arith.addf %25, %27 : vector<8x128xf32>
    %c0_5 = arith.constant 0 : index
    %c0_6 = arith.constant 0 : index
    %29 = vector.load %arg1[%c0_5, %c0_6] : memref<8x128xf32, #tpu.memory_space<vmem>>, vector<8x128xf32>
    %30 = math.sin %28 : vector<8x128xf32>
    %31 = arith.addf %29, %30 : vector<8x128xf32>
    %c0_7 = arith.constant 0 : index
    %c0_8 = arith.constant 0 : index
    %32 = vector.load %arg5[%c0_7, %c0_8] : memref<8x128xf32, #tpu.memory_space<vmem>>, vector<8x128xf32>
    tpu.vector_store %arg5[%c0_7, %c0_8], %31 {strides = array<i32>} : memref<8x128xf32, #tpu.memory_space<vmem>>, vector<8x128xf32>,
    return
  }
  func.func @transform_0(%arg0: i32) -> (i32, i32) {
    %c0_i32 = arith.constant 0 : i32
    %c0_i32_0 = arith.constant 0 : i32
    return %arg0, %c0_i32 : i32, i32
  }
  func.func @transform_1(%arg0: i32) -> (i32, i32) {
    %c0_i32 = arith.constant 0 : i32
    %c0_i32_0 = arith.constant 0 : i32
    return %arg0, %c0_i32 : i32, i32
  }
  func.func @transform_2(%arg0: i32) -> (i32, i32) {
    %c0_i32 = arith.constant 0 : i32
    %c0_i32_0 = arith.constant 0 : i32
    %c0_i32_1 = arith.constant 0 : i32
    return %c0_i32, %c0_i32_0 : i32, i32
  }
  func.func @transform_3(%arg0: i32) -> (i32, i32) {
    %c0_i32 = arith.constant 0 : i32
    %c0_i32_0 = arith.constant 0 : i32
    %c0_i32_1 = arith.constant 0 : i32
    return %c0_i32, %c0_i32_0 : i32, i32
  }
  func.func @transform_4(%arg0: i32) -> (i32, i32) {
    %c0_i32 = arith.constant 0 : i32
    %c0_i32_0 = arith.constant 0 : i32
    return %arg0, %c0_i32 : i32, i32
  }
}

</mosaic_0001>

<llo_original>
// kernel: tpu_custom_call.1
$region0: #{tpu_custom_call.1}
  #allocation0 [shape = 'u32[]', space=smem, size = 0x4, offset = 0x4, fixed_abs, tag = 'smem constant byte address 0x4 - core index']
  #allocation1 [shape = 'u32[144,128]{1,0:T(1,128)}', space=vmem, size = 0x12000, scoped, tag = 'internal scratch']
  %s0 = inlined_call_operand.vmem [shape: f32[8,128], index: 0, kind: input, shape index: {}]
  %s1 = inlined_call_operand.vmem [shape: s32[8,4], index: 1, kind: input, shape index: {}]
  %s2 = inlined_call_operand.vmem [shape: f32[4,128], index: 2, kind: input, shape index: {}]
  %s3 = inlined_call_operand.vmem [shape: f32[1,128], index: 3, kind: input, shape index: {}]
  %s4 = inlined_call_operand.hbm [shape: f32[8,128], index: 4, kind: output, shape index: {}]
  %s5 = sld [smem:[#allocation0]]
  $region26: #{tpu_custom_call.1} parent=0
    _
  %s7 = ssub.s32 1, %s5
  %s8 = scalar_select 0, %s7, %s5
  $region1: #{tpu_custom_call.1} parent=0
    #allocation2 [shape = 'u8[4096]{0}', space=vmem, size = 0x1000, scoped, tag = 'output window, operand 0, single buffered']
    #allocation3 [shape = 's32[1]{0}', space=sflag, size = 0x4, scoped, tag = 'scoped memory for tpu_custom_call.1']
    %9 = vsyncpa [#allocation3], 0
    // Predicated region
    $region2: #{tpu_custom_call.1} parent=1 // pred_check
      _
    $region3: #{tpu_custom_call.1} parent=1 // pred_check_branch
      %11 = sbr.rel (0) target = $region5
    $region4: #{tpu_custom_call.1} parent=1 // pred_region
      _
    $region5: #{tpu_custom_call.1} parent=1 // pred_fallthru
      _
    // Predicated region
    $region6: #{tpu_custom_call.1} parent=1 // pred_check
      _
    $region7: #{tpu_custom_call.1} parent=1 // pred_check_branch
      %13 = sbr.rel (0) target = $region9
    $region8: #{tpu_custom_call.1} parent=1 // pred_region
      _
    $region9: #{tpu_custom_call.1} parent=1 // pred_fallthru
      _
    // Predicated region
    $region10: #{tpu_custom_call.1} parent=1 // pred_check
      _
    $region11: #{tpu_custom_call.1} parent=1 // pred_check_branch
      %15 = sbr.rel (0) target = $region13
    $region12: #{tpu_custom_call.1} parent=1 // pred_region
      _
    $region13: #{tpu_custom_call.1} parent=1 // pred_fallthru
      _
    // Predicated region
    $region14: #{tpu_custom_call.1} parent=1 // pred_check
      _
    $region15: #{tpu_custom_call.1} parent=1 // pred_check_branch
      %17 = sbr.rel (0) target = $region17
    $region16: #{tpu_custom_call.1} parent=1 // pred_region
      _
    $region17: #{tpu_custom_call.1} parent=1 // pred_fallthru
      _
    %v18 = vld [vmem:[%s1] sm:$0xff]
    %v19 = vcvt.s32.f32 %v18
    %v20 = vld [vmem:[%s2] sm:$0xf]
    %22 = vset.pattern.permute.xlu0 0
    %23 = vperm.xlu0 %22, %v19
    %v24 = vpop.permute.xlu0 %23
    %v26 = vlaneseq
    %v27 = vshrl.u32 %v26, 7
    %v28 = vsub.s32 0, %v27
    %v29 = vrot.slane %v20, %v28
    %v30 = vmul.f32 %v24, %v29
    %31 = vset.pattern.permute.xlu0 1
    %32 = vperm.xlu0 %31, %v19
    %v33 = vpop.permute.xlu0 %32
    %v35 = vlaneseq
    %v36 = vshrl.u32 %v35, 7
    %v37 = vsub.s32 1, %v36
    %v38 = vrot.slane %v20, %v37
    %v39 = vmul.f32 %v33, %v38
    %v40 = vadd.f32 %v30, %v39
    %41 = vset.pattern.permute.xlu0 2
    %42 = vperm.xlu0 %41, %v19
    %v43 = vpop.permute.xlu0 %42
    %v45 = vlaneseq
    %v46 = vshrl.u32 %v45, 7
    %v47 = vsub.s32 2, %v46
    %v48 = vrot.slane %v20, %v47
    %v49 = vmul.f32 %v43, %v48
    %v50 = vadd.f32 %v40, %v49
    %51 = vset.pattern.permute.xlu0 3
    %52 = vperm.xlu0 %51, %v19
    %v53 = vpop.permute.xlu0 %52
    %v55 = vlaneseq
    %v56 = vshrl.u32 %v55, 7
    %v57 = vsub.s32 3, %v56
    %v58 = vrot.slane %v20, %v57
    %v59 = vmul.f32 %v53, %v58
    %v60 = vadd.f32 %v50, %v59
    %v61 = vld [vmem:[%s3] sm:$0x1]
    %v63 = vlaneseq
    %v64 = vshrl.u32 %v63, 7
    %v65 = vsub.s32 0, %v64
    %v66 = vrot.slane %v61, %v65
    %v68 = vadd.f32 %v60, %v66
    %v69 = vld [vmem:[%s0] sm:$0xff]
    %v70 = vand.u32 2147483647, %v68
    %vm71 = vcmp.le.f32.partialorder %v70, 0.7853982
    %vm72 = vcmp.lt.s32.totalorder %v68, 0
    %v73 = vand.u32 %v68, 2139095040
    %v74 = vshrl.u32 %v73, 23
    %v75 = vsub.s32 %v74, 127
    %v76 = vand.u32 2147483647, %v68
    %v77 = vand.u32 %v76, 8388607
    %v78 = vor.u32 %v77, 8388608
    %v79 = vsub.s32 0, %v78
    %v80 = vadd.s32 %v75, 1
    %vm81 = vcmp.gt.s32.totalorder %v80, 0
    %v82 = vsel %vm81, %v80, 0
    %v83 = vshrl.u32 %v82, 5
    %v84 = vand.u32 %v82, 31
    %v85 = vsub.s32 32, %v84
    %v86 = vshrl.u32 683565275, %v85
    %v87 = vshll.u32 683565275, %v84
    %v88 = vshrl.u32 2475754826, %v85
    %v89 = vor.u32 %v87, %v88
    %v90 = vshll.u32 2475754826, %v84
    %v91 = vshrl.u32 2131351028, %v85
    %v92 = vor.u32 %v90, %v91
    %v93 = vshll.u32 2131351028, %v84
    %v94 = vshrl.u32 2102212464, %v85
    %v95 = vor.u32 %v93, %v94
    %v96 = vshll.u32 2102212464, %v84
    %v97 = vshrl.u32 920167782, %v85
    %v98 = vor.u32 %v96, %v97
    %v99 = vshll.u32 920167782, %v84
    %v100 = vshrl.u32 1326507024, %v85
    %v101 = vor.u32 %v99, %v100
    %vm102 = vcmp.lt.s32.totalorder %v83, 1
    %vm103 = vcmp.lt.s32.totalorder %v83, 2
    %vm104 = vcmp.lt.s32.totalorder %v83, 3
    %vm105 = vcmp.lt.s32.totalorder %v83, 4
    %v106 = vsel %vm102, %v86, %v89
    %v107 = vsel %vm105, %v95, 2102212464
    %v108 = vsel %vm104, %v92, %v107
    %v109 = vsel %vm103, %v106, %v108
    %v110 = vsel %vm102, %v89, %v92
    %v111 = vsel %vm105, %v98, 920167782
    %v112 = vsel %vm104, %v95, %v111
    %v113 = vsel %vm103, %v110, %v112
    %v114 = vsel %vm102, %v92, %v95
    %v115 = vsel %vm105, %v101, 1326507024
    %v116 = vsel %vm104, %v98, %v115
    %v117 = vsel %vm103, %v114, %v116
    %v118 = vshll.u32 %v78, 8
    %v119 = vmul.u32.u64.compose %v118, %v117
    %v120 = vextract.low.u32 %v119
    %v121 = vextract.high.u32 %v119
    %v122 = vmul.u32.u64.compose %v118, %v113
    %v123 = vextract.low.u32 %v122
    %v124 = vextract.high.u32 %v122
    %v125 = vmul.u32 %v118, %v109
    %v126 = vadd.s32 %v121, %v123
    %vm127 = vc.u32 %v121, %v123
    %v128 = vadd.s32 %v124, 1
    %v129 = vsel %vm127, %v128, %v124
    %v130 = vadd.s32 %v125, %v129
    %v131 = vadd.s32 %v130, 536870912
    %v132 = vshrl.u32 %v131, 30
    %v133 = vshll.u32 %v132, 30
    %v134 = vsub.s32 %v130, %v133
    %vm135 = vcmp.lt.s32.totalorder %v134, 0
    %v136 = vsub.s32 0, %v134
    %v137 = vsel %vm135, %v136, %v134
    %v138 = vclz %v137
    %v139 = vsub.s32 %v138, 2
    %vm140 = vcmp.gt.s32.totalorder 0, %v139
    %v141 = vsel %vm140, 0, %v139
    %v142 = vsub.s32 32, %v141
    %v143 = vshll.u32 %v134, %v141
    %v144 = vshrl.u32 %v126, %v142
    %v145 = vor.u32 %v143, %v144
    %v146 = vsub.s32 4294967266, %v141
    %v147 = vadd.s32 %v146, 127
    %v148 = vshll.u32 %v147, 23
    %v149 = vor.u32 4788187, %v148
    %v150 = vand.u32 2147483647, %v149
    %v152 = vcvt.s32.f32 %v145
    %v153 = vmul.f32 %v152, %v150
    %v154 = vxor.u32 %v153, 2147483648
    %v155 = vsel %vm72, %v154, %v153
    %v156 = vsub.s32 4, %v132
    %v157 = vsel %vm72, %v156, %v132
    %v158 = vsel %vm71, %v68, %v155
    %v159 = vsel %vm71, 0, %v157
    %v160 = vcosq.f32.pop %v158
    %v161 = vsinq.f32.pop %v158
    %vm162 = vweird.f32 %v68
    %v163 = vadd.s32 %v159, 3
    %v164 = vand.u32 %v163, 3
    %vm165 = vcmp.lt.s32.totalorder %v164, 2
    %vm166 = vcmp.eq.s32.totalorder %v164, 0
    %v167 = vxor.u32 %v161, 2147483648
    %v168 = vsel %vm166, %v160, %v167
    %vm169 = vcmp.eq.s32.totalorder %v164, 2
    %v170 = vxor.u32 %v160, 2147483648
    %v171 = vsel %vm169, %v170, %v161
    %v172 = vsel %vm165, %v168, %v171
    %v173 = vsel %vm162, nan, %v172
    %v174 = vadd.f32 %v69, %v173
    %175 = vst [vmem:[#allocation2] sm:$0xff] %v174
    // Predicated region
    $region18: #{tpu_custom_call.1} parent=1 // pred_check
      _
    $region19: #{tpu_custom_call.1} parent=1 // pred_check_branch
      %177 = sbr.rel (0) target = $region21
    $region20: #{tpu_custom_call.1} parent=1 // pred_region
      %s179 = ssub.s32 128, 128
      %180 = vsyncadd [#allocation3], %s179
      %s182 = sshll.u32 [#allocation2], 4
      %s183 = int_to_ptr.vmem [resolvable:$true] %s182
      %185 = dma.vmem_to_hbm [thread:$0]  %s183, 128, %s4, [#allocation3]
    $region21: #{tpu_custom_call.1} parent=1 // pred_fallthru
      _
    // Predicated region
    $region22: #{tpu_custom_call.1} parent=1 // pred_check
      _
    $region23: #{tpu_custom_call.1} parent=1 // pred_check_branch
      %187 = sbr.rel (0) target = $region25
    $region24: #{tpu_custom_call.1} parent=1 // pred_region
      %188 = dma.done [#allocation3], 128
    $region25: #{tpu_custom_call.1} parent=1 // pred_fallthru
      _
    %189 = vsyncpa [#allocation3], 1

</llo_original>
